<compile_context>
chip_gen: v5e
topology: v5e:2x2
jax: 0.10.0
libtpu: 0.0.40
codegen_flags: <defaults>
</compile_context>

<pallas_src>
import functools

import jax
import jax.numpy as jnp
import numpy as np
from jax.experimental import pallas as pl
from jax.experimental.pallas import tpu as pltpu

# Rows per grid step.  Capped at 8192 for the lane-narrow layout (see header note);
# clamped to the actual row count so tiny inputs get a single exact block.
DEFAULT_TM = 8192
_VMEM_LIMIT_BYTES = 48 * 1024 * 1024  # explicit: > v5e 16 MiB default, < v7x 64 MiB phys


# ---------------- Pallas kernel: rays || num_samples column ----------------
def _append_num_samples_kernel(ns_ref, rays_ref, out_ref):
    """ns_ref: SMEM (1,) int32; rays_ref: (TM, D) VMEM; out_ref: (TM, D+1) VMEM."""
    rays = rays_ref[...]
    rows = rays.shape[0]
    ns_col = jnp.full((rows, 1), ns_ref[0], dtype=out_ref.dtype)
    # Single fused store per tile (review: avoid two masked partial stores that
    # both land in the same (8,128) lane tile).
    out_ref[...] = jnp.concatenate([rays.astype(out_ref.dtype), ns_col], axis=-1)


def _choose_tm(num_rows, requested=DEFAULT_TM):
    if num_rows <= requested:
        return int(num_rows)   # single full-array block (always a legal block shape)
    return int(requested)


@functools.partial(jax.jit, static_argnames=("tm",))
def _append_num_samples_pallas(rays_flat, num_samples, tm):
    m, d = rays_flat.shape
    ns = jnp.asarray(num_samples, jnp.int32).reshape(1)
    grid = (pl.cdiv(m, tm),)
    return pl.pallas_call(
        _append_num_samples_kernel,
        out_shape=jax.ShapeDtypeStruct((m, d + 1), rays_flat.dtype),
        grid_spec=pltpu.PrefetchScalarGridSpec(
            num_scalar_prefetch=1,
            grid=grid,
            in_specs=[pl.BlockSpec((tm, d), lambda i, ns_ref: (i, 0))],
            out_specs=pl.BlockSpec((tm, d + 1), lambda i, ns_ref: (i, 0)),
        ),
        compiler_params=pltpu.CompilerParams(
            dimension_semantics=("parallel",),
            vmem_limit_bytes=_VMEM_LIMIT_BYTES),
    )(ns, rays_flat)


# ------------- module forward (python glue for the scalar dict fields) -------------
def generate_num_samples_embedding_forward(
        x, render_kwargs=None, *,
        sample_range=(32, 192),
        inference_samples=128,
        total_samples=192,
        training=False,
        rng=None):
    """Mirrors GenerateNumSamplesEmbedding.forward for the 'rays' entry of x."""
    if training:
        # TODO(synk): host-side numpy RNG exactly like the PyTorch module
        # (np.random.rand()); np.round vs torch rounding may differ by 1 at .5.
        rng = rng if rng is not None else np.random.default_rng()
        ns = float(rng.random()) * (sample_range[1] - sample_range[0]) + sample_range[0]
        num_samples = int(np.round(ns))
    else:
        num_samples = int(inference_samples)

    rays = x['rays']
    lead = rays.shape[:-1]
    d = rays.shape[-1]
    rays_flat = rays.reshape(-1, d)
    m = rays_flat.shape[0]
    tm = _choose_tm(m)

    out_flat = _append_num_samples_pallas(rays_flat, num_samples, tm)

    new_x = dict(x)
    new_x['num_samples'] = num_samples
    new_x['total_samples'] = int(total_samples)
    new_x['rays'] = out_flat.reshape(*lead, d + 1)
    return new_x


if __name__ == "__main__":
    key = jax.random.PRNGKey(0)
    ko, kd = jax.random.split(key)

    # Small demo shapes: batch=2, 8 rays each, 8 ray channels (o, d, near, far).
    B, R, D = 2, 8, 8
    origins = jax.random.normal(ko, (B, R, 3), jnp.float32)
    dirs = jax.random.normal(kd, (B, R, 3), jnp.float32)
    dirs = dirs / jnp.linalg.norm(dirs, axis=-1, keepdims=True)
    nearfar = jnp.broadcast_to(jnp.array([0.1, 4.0], jnp.float32), (B, R, 2))
    rays = jnp.concatenate([origins, dirs, nearfar], axis=-1)   # (2, 8, 8)

    x = {'rays': rays}
    out = generate_num_samples_embedding_forward(
        x, {}, sample_range=(32, 192), inference_samples=128,
        total_samples=192, training=False)

    new_rays = jax.block_until_ready(out['rays'])

    # Shape / field checks.
    assert new_rays.shape == (B, R, D + 1)
    assert out['num_samples'] == 128
    assert out['total_samples'] == 192

    # Reference check against the PyTorch semantics.
    ref = jnp.concatenate([rays, jnp.ones_like(rays[..., :1]) * 128.0], axis=-1)
    assert jnp.allclose(new_rays, ref), "mismatch vs reference concat"

    # Also exercise the multi-block + ragged-last-block path with a tiny tile.
    m2, d2 = 24, 8
    rays2 = jax.random.normal(jax.random.PRNGKey(1), (m2, d2), jnp.float32)
    out2 = jax.block_until_ready(_append_num_samples_pallas(rays2, 77, 16))
    ref2 = jnp.concatenate([rays2, jnp.full((m2, 1), 77.0, jnp.float32)], axis=-1)
    assert out2.shape == (m2, d2 + 1)
    assert jnp.allclose(out2, ref2), "mismatch on ragged multi-block path"

    print("KERNEL_OK")
</pallas_src>

<mosaic_0001>
module attributes {stable_mosaic.version = 11 : i64} {
  func.func @_append_num_samples_kernel(%arg0: i32, %arg1: memref<1xi32, #tpu.memory_space<smem>>, %arg2: memref<16x8xf32, #tpu.memory_space<vmem>>, %arg3: memref<16x9xf32, #tpu.memory_space<vmem>>) attributes {dimension_semantics = [#tpu.dimension_semantics<parallel>], iteration_bounds = array<i64: 1>, scalar_prefetch = 1 : i64, scratch_operands = 0 : i64, tpu.core_type = #tpu.core_type<tc>, window_params = [{transform_indices = @transform_0, window_bounds = array<i64: 16, 8>}, {transform_indices = @transform_1, window_bounds = array<i64: 16, 9>}]} {
    %c0 = arith.constant 0 : index
    %c0_0 = arith.constant 0 : index
    %0 = vector.load %arg2[%c0, %c0_0] : memref<16x8xf32, #tpu.memory_space<vmem>>, vector<16x8xf32>
    %c0_1 = arith.constant 0 : index
    %1 = memref.load %arg1[%c0_1] : memref<1xi32, #tpu.memory_space<smem>>
    %2 = arith.sitofp %1 : i32 to f32
    %3 = vector.broadcast %2 : f32 to vector<16x1xf32>
    %4 = tpu.concatenate %0, %3 in 1 : vector<16x8xf32>, vector<16x1xf32> -> vector<16x9xf32>
    %c0_2 = arith.constant 0 : index
    %c0_3 = arith.constant 0 : index
    %5 = vector.load %arg3[%c0_2, %c0_3] : memref<16x9xf32, #tpu.memory_space<vmem>>, vector<16x9xf32>
    tpu.vector_store %arg3[%c0_2, %c0_3], %4 {strides = array<i32>} : memref<16x9xf32, #tpu.memory_space<vmem>>, vector<16x9xf32>,
    return
  }
  func.func @transform_0(%arg0: i32, %arg1: memref<1xi32, #tpu.memory_space<smem>>) -> (i32, i32) {
    %c0_i32 = arith.constant 0 : i32
    %c0_i32_0 = arith.constant 0 : i32
    return %arg0, %c0_i32 : i32, i32
  }
  func.func @transform_1(%arg0: i32, %arg1: memref<1xi32, #tpu.memory_space<smem>>) -> (i32, i32) {
    %c0_i32 = arith.constant 0 : i32
    %c0_i32_0 = arith.constant 0 : i32
    return %arg0, %c0_i32 : i32, i32
  }
}

</mosaic_0001>

<llo_original>
// kernel: _append_num_samples_pallas.1
$region0: #{_append_num_samples_pallas.1}
  #allocation0 [shape = 'u32[]', space=smem, size = 0x4, offset = 0x4, fixed_abs, tag = 'smem constant byte address 0x4 - core index']
  #allocation1 [shape = 'u32[72,128]{1,0:T(1,128)}', space=vmem, size = 0x9000, scoped, tag = 'internal scratch']
  #allocation2 [shape = 's32[1]{0}', space=sflag, size = 0x4, scoped, tag = 'scoped memory for _append_num_samples_pallas.1']
  #allocation3 [shape = 's32[1]{0:T(128)S(6)}', space=smem, size = 0x200, scoped, tag = 'prefetched SMEM operand 0']
  %s0 = inlined_call_operand.<no memory space> [shape: s32[1], index: 0, kind: input, shape index: {}]
  %s1 = inlined_call_operand.vmem [shape: f32[16,8], index: 1, kind: input, shape index: {}]
  %s2 = inlined_call_operand.hbm [shape: f32[16,9], index: 2, kind: output, shape index: {}]
  %s3 = sld [smem:[#allocation0]]
  $region14: #{_append_num_samples_pallas.1} parent=0
    _
  %s5 = ssub.s32 1, %s3
  %s6 = scalar_select 0, %s5, %s3
  %7 = sst [smem:[#allocation3]] %s0
  $region1: #{_append_num_samples_pallas.1} parent=0
    #allocation4 [shape = 'u8[8192]{0}', space=vmem, size = 0x2000, scoped, tag = 'output window, operand 0, single buffered']
    #allocation5 [shape = 's32[1]{0}', space=sflag, size = 0x4, scoped, tag = 'scoped memory for _append_num_samples_pallas.1']
    %8 = vsyncpa [#allocation5], 0
    // Predicated region
    $region2: #{_append_num_samples_pallas.1} parent=1 // pred_check
      _
    $region3: #{_append_num_samples_pallas.1} parent=1 // pred_check_branch
      %10 = sbr.rel (0) target = $region5
    $region4: #{_append_num_samples_pallas.1} parent=1 // pred_region
      _
    $region5: #{_append_num_samples_pallas.1} parent=1 // pred_fallthru
      _
    %v11 = vld [vmem:[%s1] sm:$0xff]
    %v12 = vld [vmem:[%s1 + $0x8] sm:$0xff]
    %s13 = sld [smem:[#allocation3]]
    %s14 = scvt.s32.f32 %s13
    %v15 = vstv %s14
    %vm16 = vcmask 64512
    %v17 = vsel %vm16, %v11, %v15
    %v18 = vsel %vm16, %v12, %v15
    %vm19 = vcmask 72704
    %20 = vst.msk [vmem:[#allocation4] sm:$0xff] %vm19, %v17
    %21 = vst.msk [vmem:[#allocation4 + $0x8] sm:$0xff] %vm19, %v18
    // Predicated region
    $region6: #{_append_num_samples_pallas.1} parent=1 // pred_check
      _
    $region7: #{_append_num_samples_pallas.1} parent=1 // pred_check_branch
      %23 = sbr.rel (0) target = $region9
    $region8: #{_append_num_samples_pallas.1} parent=1 // pred_region
      %25 = vsyncadd [#allocation5], 0
      %s26 = sshll.u32 [#allocation4], 4
      %s27 = int_to_ptr.vmem [resolvable:$true] %s26
      %s28 = sshll.u32 %s2, 4
      %s29 = int_to_ptr.hbm [resolvable:$true] %s28
      %34 = dma.vmem_to_hbm [thread:$0]  %s27, 256, %s29, [#allocation5], 128, 128, 8
    $region9: #{_append_num_samples_pallas.1} parent=1 // pred_fallthru
      _
    // Predicated region
    $region10: #{_append_num_samples_pallas.1} parent=1 // pred_check
      _
    $region11: #{_append_num_samples_pallas.1} parent=1 // pred_check_branch
      %36 = sbr.rel (0) target = $region13
    $region12: #{_append_num_samples_pallas.1} parent=1 // pred_region
      %38 = dma.done [#allocation5], 256
    $region13: #{_append_num_samples_pallas.1} parent=1 // pred_fallthru
      _
    %39 = vsyncpa [#allocation5], 1

</llo_original>
